<compile_context>
chip_gen: v7x
topology: tpu7x:2x2x1
jax: 0.10.0
libtpu: 0.0.40
codegen_flags: <defaults>
</compile_context>

<pallas_src>
import functools

import jax
import jax.numpy as jnp
from jax import lax
from jax.experimental import pallas as pl
from jax.experimental.pallas import tpu as pltpu


_VMEM_BUDGET = 22 * 1024 * 1024     # tile-sizing budget (leave headroom in 32 MiB)
_VMEM_LIMIT = 32 * 1024 * 1024      # scoped-VMEM limit requested from Mosaic


def _round_up(x, m):
    return ((x + m - 1) // m) * m


def _choose_pixel_tile(P, target):
    """Pick a lane-dense pixel tile; prefer one that divides the 128-aligned
    extent exactly so no output crop copy is needed."""
    Pp0 = _round_up(P, 128)
    target = min(max(128, _round_up(target, 128)), Pp0)
    d_total = Pp0 // 128
    t = target // 128
    best = 1
    for cand in range(t, 0, -1):
        if d_total % cand == 0:
            best = cand
            break
    Tp = best * 128
    if Tp * 4 >= target or Tp == Pp0:
        return Tp, Pp0
    # Pathological extent (no decent divisor): fall back to a padded tiling.
    return target, _round_up(Pp0, target)


def _choose_channel_tile(C, target, align):
    target = max(align, target)
    if C <= target:
        # Single tile covering the full channel extent (block dim == array dim
        # is allowed even when unaligned) -> no channel padding, no crop.
        return C, C
    nc = -(-C // target)
    Tc = _round_up(-(-C // nc), align)
    return Tc, nc * Tc


def _vmem_bytes(Tc, Tp, Kp, in_itemsize, out_itemsize, is_f32, f32_chunks):
    out_blk = 2 * Tc * Tp * out_itemsize          # double-buffered output tile
    pooled_blk = 2 * Tc * Kp * in_itemsize        # double-buffered pooled tile
    spx_blk = 2 * Tp * 4                          # double-buffered spx tile
    onehot = Kp * Tp * 2                          # bf16 one-hot scratch
    onehot_build = Kp * Tp * 4                    # iota/compare temporaries
    acc = Tc * Tp * 4                             # f32 accumulator temp
    chunks = (f32_chunks * 2 + 2 * 4) * Tc * Kp if is_f32 else 0
    return out_blk + pooled_blk + spx_blk + onehot + onehot_build + acc + chunks


def _unpool_kernel(spx_ref, pooled_ref, out_ref, onehot_ref, *, f32_chunks):
    # spx_ref:    (1, 1, Tp)   int32   label of every pixel in this tile
    # pooled_ref: (1, Tc, Kp)  float   per-superpixel features (K padded to 128)
    # out_ref:    (1, Tc, Tp)  float   gathered per-pixel features
    # onehot_ref: (Kp, Tp)     bf16    VMEM scratch, reused across channel tiles

    # Rebuild the one-hot only on the first channel tile of each pixel tile
    # (channel axis is innermost and "arbitrary", so the scratch carries it).
    @pl.when(pl.program_id(2) == 0)
    def _build_onehot():
        kp, tp = onehot_ref.shape
        spx = spx_ref[0]                                    # (1, Tp)
        k_iota = lax.broadcasted_iota(jnp.int32, (kp, tp), 0)
        onehot_ref[...] = (k_iota == spx).astype(jnp.bfloat16)

    pooled = pooled_ref[0]                                  # (Tc, Kp)
    onehot = onehot_ref[...]                                # (Kp, Tp) bf16

    if pooled.dtype == jnp.float32:
        # f32 gather via bf16 chunks whose sum reconstructs the f32 value;
        # each chunk is a bf16 matmul with f32 accumulation (exact for
        # normal-range f32 at f32_chunks=3).
        acc = None
        residual = pooled
        for i in range(f32_chunks):
            chunk = residual.astype(jnp.bfloat16)
            part = jnp.dot(chunk, onehot, preferred_element_type=jnp.float32)
            acc = part if acc is None else acc + part
            if i + 1 < f32_chunks:
                residual = residual - chunk.astype(jnp.float32)
    else:
        # bf16 (or another MXU-native float) pooled: a single matmul is exact.
        # TODO(synk): integer pooled dtypes would need a non-MXU gather path.
        acc = jnp.dot(pooled, onehot.astype(pooled.dtype),
                      preferred_element_type=jnp.float32)

    out_ref[0] = acc.astype(out_ref.dtype)


def sup_pix_unpool(pooled, spx, *, pixel_tile=2048, channel_tile=256,
                   f32_chunks=3):
    """pooled: (B, C, K) float, spx: (B, H, W) int -> (B, C, H, W).

    out[b, c, h, w] = pooled[b, c, spx[b, h, w]]

    `f32_chunks` controls the f32 -> n x bf16 split for the MXU gather
    (3 = exact for normal-range f32; 2 is ~2^-16 relative, cheaper on v5e).
    """
    B, C, K = pooled.shape
    Bs, H, W = spx.shape
    assert Bs == B, "batch mismatch between pooled and spx"
    P = H * W

    itemsize = jnp.dtype(pooled.dtype).itemsize
    is_f32 = pooled.dtype == jnp.float32
    c_align = 8 if itemsize >= 4 else 16

    Kp = _round_up(K, 128)
    Tp, Pp = _choose_pixel_tile(P, pixel_tile)
    Tc, Cp = _choose_channel_tile(C, channel_tile, c_align)

    # Shrink tiles if the per-step VMEM footprint would blow the budget
    # (matters only for large K / large channel counts).
    while _vmem_bytes(Tc, Tp, Kp, itemsize, itemsize, is_f32,
                      f32_chunks) > _VMEM_BUDGET:
        if Tp > 256:
            Tp, Pp = _choose_pixel_tile(P, Tp // 2)
        elif Tc > 32:
            Tc, Cp = _choose_channel_tile(C, Tc // 2, c_align)
        else:
            break

    # Pad inputs only when needed (cheap: pooled is small, spx is C x smaller
    # than the output).
    pooled_p = pooled
    if Cp != C or Kp != K:
        pooled_p = jnp.pad(pooled, ((0, 0), (0, Cp - C), (0, Kp - K)))
    spx_flat = spx.reshape(B, 1, P)
    if spx_flat.dtype != jnp.int32:
        spx_flat = spx_flat.astype(jnp.int32)
    if Pp != P:
        spx_flat = jnp.pad(spx_flat, ((0, 0), (0, 0), (0, Pp - P)))

    grid = (B, Pp // Tp, Cp // Tc)
    kernel = functools.partial(_unpool_kernel, f32_chunks=f32_chunks)

    out = pl.pallas_call(
        kernel,
        out_shape=jax.ShapeDtypeStruct((B, Cp, Pp), pooled.dtype),
        grid_spec=pltpu.PrefetchScalarGridSpec(
            num_scalar_prefetch=0,
            grid=grid,
            in_specs=[
                # spx tile depends only on (batch, pixel tile): it stays
                # resident across the innermost channel axis.
                pl.BlockSpec((1, 1, Tp), lambda b, pi, ci: (b, 0, pi)),
                # pooled tile depends only on (batch, channel tile); small,
                # re-DMA'd per step and hidden by the pipeline.
                pl.BlockSpec((1, Tc, Kp), lambda b, pi, ci: (b, ci, 0)),
            ],
            out_specs=pl.BlockSpec((1, Tc, Tp), lambda b, pi, ci: (b, ci, pi)),
            scratch_shapes=[pltpu.VMEM((Kp, Tp), jnp.bfloat16)],
        ),
        compiler_params=pltpu.CompilerParams(
            # Distinct output block per grid point on the first two axes
            # (megacore-friendly); the innermost channel axis is "arbitrary"
            # because the one-hot scratch carries state across it.
            dimension_semantics=("parallel", "parallel", "arbitrary"),
            vmem_limit_bytes=_VMEM_LIMIT,
        ),
    )(spx_flat, pooled_p)

    # Crop only if we actually padded (the crop is an extra full HBM copy of
    # the output, so aligned shapes skip it entirely).
    if Cp != C or Pp != P:
        out = out[:, :C, :P]
    return out.reshape(B, C, H, W)


def sup_pix_unpool_ref(pooled, spx):
    """Pure-JAX reference with the exact PyTorch semantics."""
    B, C, K = pooled.shape
    _, H, W = spx.shape
    idx = spx.astype(jnp.int32).reshape(B, 1, H * W)
    idx = jnp.broadcast_to(idx, (B, C, H * W))
    out = jnp.take_along_axis(pooled, idx, axis=2)
    return out.reshape(B, C, H, W)


if __name__ == "__main__":
    key = jax.random.PRNGKey(0)
    k_pool, k_spx = jax.random.split(key)

    B, C, H, W = 2, 4, 16, 16
    K = 8  # number of superpixel labels (static, from pooled.shape)
    pooled = jax.random.normal(k_pool, (B, C, K), dtype=jnp.float32)
    spx = jax.random.randint(k_spx, (B, H, W), 0, K, dtype=jnp.int32)

    out = sup_pix_unpool(pooled, spx)
    out = jax.block_until_ready(out)

    ref = sup_pix_unpool_ref(pooled, spx)
    assert out.shape == (B, C, H, W)
    assert jnp.allclose(out, ref, rtol=1e-6, atol=1e-6), \
        "Pallas output mismatch vs reference"

    print("KERNEL_OK")
</pallas_src>

<mosaic_0001>
module attributes {stable_mosaic.version = 11 : i64} {
  func.func @_unpool_kernel(%arg0: i32, %arg1: i32, %arg2: i32, %arg3: memref<1x1x256xi32, #tpu.memory_space<vmem>>, %arg4: memref<1x4x128xf32, #tpu.memory_space<vmem>>, %arg5: memref<1x4x256xf32, #tpu.memory_space<vmem>>, %arg6: memref<128x256xbf16, #tpu.memory_space<vmem>>) attributes {dimension_semantics = [#tpu.dimension_semantics<parallel>, #tpu.dimension_semantics<parallel>, #tpu.dimension_semantics<arbitrary>], iteration_bounds = array<i64: 2, 1, 1>, scalar_prefetch = 0 : i64, scratch_operands = 1 : i64, tpu.core_type = #tpu.core_type<tc>, window_params = [{transform_indices = @transform_0, window_bounds = array<i64: 1, 1, 256>}, {transform_indices = @transform_1, window_bounds = array<i64: 1, 4, 128>}, {transform_indices = @transform_2, window_bounds = array<i64: 1, 4, 256>}]} {
    %c0_i32 = arith.constant 0 : i32
    %0 = arith.cmpi eq, %arg2, %c0_i32 : i32
    %1 = arith.extui %0 : i1 to i32
    %c0_i32_0 = arith.constant 0 : i32
    %2 = arith.cmpi ne, %1, %c0_i32_0 : i32
    scf.if %2 {
      %c0_10 = arith.constant 0 : index
      %c0_11 = arith.constant 0 : index
      %c0_12 = arith.constant 0 : index
      %21 = vector.load %arg3[%c0_10, %c0_11, %c0_12] : memref<1x1x256xi32, #tpu.memory_space<vmem>>, vector<1x1x256xi32>
      %22 = vector.shape_cast %21 : vector<1x1x256xi32> to vector<1x256xi32>
      %23 = tpu.iota {dimensions = array<i32: 0>} : vector<128x256xi32>
      %24 = vector.broadcast %22 : vector<1x256xi32> to vector<128x256xi32>
      %25 = arith.cmpi eq, %23, %24 : vector<128x256xi32>
      %26 = arith.extui %25 : vector<128x256xi1> to vector<128x256xi32>
      %27 = arith.sitofp %26 : vector<128x256xi32> to vector<128x256xf32>
      %28 = arith.truncf %27 : vector<128x256xf32> to vector<128x256xbf16>
      %c0_13 = arith.constant 0 : index
      %c0_14 = arith.constant 0 : index
      %29 = vector.load %arg6[%c0_13, %c0_14] : memref<128x256xbf16, #tpu.memory_space<vmem>>, vector<128x256xbf16>
      tpu.vector_store %arg6[%c0_13, %c0_14], %28 {strides = array<i32>} : memref<128x256xbf16, #tpu.memory_space<vmem>>, vector<128x256xbf16>,
    } else {
    }
    %c0 = arith.constant 0 : index
    %c0_1 = arith.constant 0 : index
    %c0_2 = arith.constant 0 : index
    %3 = vector.load %arg4[%c0, %c0_1, %c0_2] : memref<1x4x128xf32, #tpu.memory_space<vmem>>, vector<1x4x128xf32>
    %4 = vector.shape_cast %3 : vector<1x4x128xf32> to vector<4x128xf32>
    %c0_3 = arith.constant 0 : index
    %c0_4 = arith.constant 0 : index
    %5 = vector.load %arg6[%c0_3, %c0_4] : memref<128x256xbf16, #tpu.memory_space<vmem>>, vector<128x256xbf16>
    %6 = arith.truncf %4 : vector<4x128xf32> to vector<4x128xbf16>
    %cst = arith.constant dense<0.000000e+00> : vector<4x256xf32>
    %7 = tpu.matmul %6, %5, %cst {dimension_numbers = #tpu.dot_dimension_numbers<[1], [0], [0], [1], [0, 0, 1, 1], [], []>} : vector<4x128xbf16>, vector<128x256xbf16>, vector<4x256xf32> -> vector<4x256xf32>
    %8 = arith.extf %6 : vector<4x128xbf16> to vector<4x128xf32>
    %9 = arith.subf %4, %8 : vector<4x128xf32>
    %10 = arith.truncf %9 : vector<4x128xf32> to vector<4x128xbf16>
    %cst_5 = arith.constant dense<0.000000e+00> : vector<4x256xf32>
    %11 = tpu.matmul %10, %5, %cst_5 {dimension_numbers = #tpu.dot_dimension_numbers<[1], [0], [0], [1], [0, 0, 1, 1], [], []>} : vector<4x128xbf16>, vector<128x256xbf16>, vector<4x256xf32> -> vector<4x256xf32>
    %12 = arith.addf %7, %11 : vector<4x256xf32>
    %13 = arith.extf %10 : vector<4x128xbf16> to vector<4x128xf32>
    %14 = arith.subf %9, %13 : vector<4x128xf32>
    %15 = arith.truncf %14 : vector<4x128xf32> to vector<4x128xbf16>
    %cst_6 = arith.constant dense<0.000000e+00> : vector<4x256xf32>
    %16 = tpu.matmul %15, %5, %cst_6 {dimension_numbers = #tpu.dot_dimension_numbers<[1], [0], [0], [1], [0, 0, 1, 1], [], []>} : vector<4x128xbf16>, vector<128x256xbf16>, vector<4x256xf32> -> vector<4x256xf32>
    %17 = arith.addf %12, %16 : vector<4x256xf32>
    %c0_7 = arith.constant 0 : index
    %c0_8 = arith.constant 0 : index
    %c0_9 = arith.constant 0 : index
    %18 = vector.load %arg5[%c0_7, %c0_8, %c0_9] : memref<1x4x256xf32, #tpu.memory_space<vmem>>, vector<1x4x256xf32>
    %19 = vector.shape_cast %18 : vector<1x4x256xf32> to vector<4x256xf32>
    %20 = vector.shape_cast %17 : vector<4x256xf32> to vector<1x4x256xf32>
    tpu.vector_store %arg5[%c0_7, %c0_8, %c0_9], %20 {strides = array<i32>} : memref<1x4x256xf32, #tpu.memory_space<vmem>>, vector<1x4x256xf32>,
    return
  }
  func.func @transform_0(%arg0: i32, %arg1: i32, %arg2: i32) -> (i32, i32, i32) {
    %c0_i32 = arith.constant 0 : i32
    %c0_i32_0 = arith.constant 0 : i32
    return %arg0, %c0_i32, %arg1 : i32, i32, i32
  }
  func.func @transform_1(%arg0: i32, %arg1: i32, %arg2: i32) -> (i32, i32, i32) {
    %c0_i32 = arith.constant 0 : i32
    %c0_i32_0 = arith.constant 0 : i32
    return %arg0, %arg2, %c0_i32 : i32, i32, i32
  }
  func.func @transform_2(%arg0: i32, %arg1: i32, %arg2: i32) -> (i32, i32, i32) {
    %c0_i32 = arith.constant 0 : i32
    return %arg0, %arg2, %arg1 : i32, i32, i32
  }
}

</mosaic_0001>

<llo_original>
// kernel: tpu_custom_call.1
$region0: #{tpu_custom_call.1}
  #allocation0 [shape = 'u32[]', space=smem, size = 0x4, offset = 0x4, fixed_abs, tag = 'smem constant byte address 0x4 - core index']
  #allocation1 [shape = 'u32[144,128]{1,0:T(1,128)}', space=vmem, size = 0x12000, scoped, tag = 'internal scratch']
  #allocation2 [shape = 'bf16[128,256]{1,0:T(16,128)(2,1)}', space=vmem, size = 0x10000, scoped, tag = 'scratch operand']
  %s0 = inlined_call_operand.hbm [shape: s32[2,1,256], index: 0, kind: input, shape index: {}]
  %s1 = inlined_call_operand.hbm [shape: f32[2,4,128], index: 1, kind: input, shape index: {}]
  %s2 = inlined_call_operand.hbm [shape: f32[2,4,256], index: 2, kind: output, shape index: {}]
  %s3 = sld [smem:[#allocation0]]
  $region53: #{tpu_custom_call.1} parent=0
    _
  %s5 = ssub.s32 1, %s3
  %s6 = scalar_select 0, %s5, %s3
  $region1: #{tpu_custom_call.1} parent=0
    #allocation3 [shape = 'u8[2048]{0}', space=vmem, size = 0x800, scoped, tag = 'input window, operand 0']
    #allocation4 [shape = 's32[2]{0}', space=sflag, size = 0x8, scoped, tag = 'scoped memory for tpu_custom_call.1']
    #allocation5 [shape = 's32[2]{0}', space=sflag, size = 0x8, scoped, tag = 'scoped memory for tpu_custom_call.1']
    #allocation6 [shape = 'u8[4096]{0}', space=vmem, size = 0x1000, scoped, tag = 'input window, operand 1']
    #allocation7 [shape = 's32[2]{0}', space=sflag, size = 0x8, scoped, tag = 'scoped memory for tpu_custom_call.1']
    #allocation8 [shape = 'u8[8192]{0}', space=vmem, size = 0x2000, scoped, tag = 'output window, operand 0']
    %7 = vsyncpa [#allocation4], 0
    %s8 = scalar_lea.sflag [#allocation4], 1
    %9 = vsyncpa %s8, 0
    %10 = vsyncpa [#allocation7], 0
    %s11 = scalar_lea.sflag [#allocation7], 1
    %12 = vsyncpa %s11, 0
    %13 = vsyncpa [#allocation5], 0
    %s14 = scalar_lea.sflag [#allocation5], 1
    %15 = vsyncpa %s14, 0
    loop: start=0, step=1, limit=4
    $region2: #{tpu_custom_call.1} parent=1 // loop_pre_header
      _
    $region3: #{tpu_custom_call.1} parent=1 // loop_header
      %s17 = sphi 0, %s21
      %p18 = scmp.ge.s32.totalorder %s17, 4
      %s24 = sphi 0, %s43
      %s25 = sphi 0, %s39
      %s26 = sphi 0, %s35
      %s27 = sphi 0, %s24
      %s28 = sphi 0, %s25
      %s29 = sphi 0, %s26
      %s30 = sphi 0, %s27
      %s31 = sphi 0, %s28
      %s32 = sphi 0, %s29
      %s48 = sphi 0, %s50
      %s51 = sphi 0, %s48
      %s52 = sphi 0, %s51
      %s68 = sphi 0, %s52
      %s76 = sphi 0, %s78
      %s79 = sphi 0, %s76
      %s80 = sphi 0, %s79
      %s96 = sphi 0, %s80
      %s106 = sphi 0, %s108
      %s109 = sphi 0, %s106
      %s110 = sphi 0, %s109
      %s126 = sphi 0, %s110
    $region4: #{tpu_custom_call.1} parent=1 // loop_header_branch
      %20 = sbr.rel (%p18) target = $region8
    $region5: #{tpu_custom_call.1} parent=1 // loop_body
      %s22 = ssub.s32 %s17, 1
      %s23 = ssub.s32 %s17, 2
      %s33 = sadd.s32 1, %s26
      %p34 = scmp.ge.s32.totalorder %s33, 1
      %s35 = scalar_select %p34, 0, %s33
      %s36 = sadd.s32 1, %s25
      %s37 = scalar_select %p34, %s36, %s25
      %p38 = scmp.ge.s32.totalorder %s37, 1
      %s39 = scalar_select %p38, 0, %s37
      %s40 = sadd.s32 1, %s24
      %s41 = scalar_select %p38, %s40, %s24
      %p42 = scmp.ge.s32.totalorder %s41, 2
      %s43 = scalar_select %p42, 0, %s41
      %s44 = ssub.s32 %s24, %s43
      %s45 = ssub.s32 %s25, %s39
      %s46 = sor.u32 %s44, %s45
      %p47 = scmp.eq.s32.totalorder %s46, 0
      %s49 = sadd.s32 %s48, 1
      %s50 = scalar_select %p47, %s48, %s49
      %p53 = pneg %p47
      %p54 = scmp.eq.s32.totalorder %s17, 1
      %p55 = por %p53, %p54
      %p56 = scmp.ne.s32.totalorder %s48, %s51
      %p57 = scmp.eq.s32.totalorder %s17, 0
      %p58 = por %p56, %p57
      %p59 = scmp.ne.s32.totalorder %s48, %s51
      %p60 = scmp.eq.s32.totalorder %s22, 1
      %p61 = por %p59, %p60
      %p62 = scmp.ne.s32.totalorder %s51, %s52
      %p63 = scmp.eq.s32.totalorder %s22, 0
      %p64 = por %p62, %p63
      %p65 = scmp.ne.s32.totalorder %s51, %s52
      %p66 = scmp.eq.s32.totalorder %s23, 1
      %p67 = por %p65, %p66
      %p69 = scmp.ne.s32.totalorder %s52, %s68
      %p70 = scmp.eq.s32.totalorder %s23, 0
      %p71 = por %p69, %p70
      %s72 = ssub.s32 %s24, %s43
      %s73 = ssub.s32 %s26, %s35
      %s74 = sor.u32 %s72, %s73
      %p75 = scmp.eq.s32.totalorder %s74, 0
      %s77 = sadd.s32 %s76, 1
      %s78 = scalar_select %p75, %s76, %s77
      %p81 = pneg %p75
      %p82 = scmp.eq.s32.totalorder %s17, 1
      %p83 = por %p81, %p82
      %p84 = scmp.ne.s32.totalorder %s76, %s79
      %p85 = scmp.eq.s32.totalorder %s17, 0
      %p86 = por %p84, %p85
      %p87 = scmp.ne.s32.totalorder %s76, %s79
      %p88 = scmp.eq.s32.totalorder %s22, 1
      %p89 = por %p87, %p88
      %p90 = scmp.ne.s32.totalorder %s79, %s80
      %p91 = scmp.eq.s32.totalorder %s22, 0
      %p92 = por %p90, %p91
      %p93 = scmp.ne.s32.totalorder %s79, %s80
      %p94 = scmp.eq.s32.totalorder %s23, 1
      %p95 = por %p93, %p94
      %p97 = scmp.ne.s32.totalorder %s80, %s96
      %p98 = scmp.eq.s32.totalorder %s23, 0
      %p99 = por %p97, %p98
      %s100 = ssub.s32 %s24, %s43
      %s101 = ssub.s32 %s26, %s35
      %s102 = sor.u32 %s100, %s101
      %s103 = ssub.s32 %s25, %s39
      %s104 = sor.u32 %s102, %s103
      %p105 = scmp.eq.s32.totalorder %s104, 0
      %s107 = sadd.s32 %s106, 1
      %s108 = scalar_select %p105, %s106, %s107
      %p111 = pneg %p105
      %p112 = scmp.eq.s32.totalorder %s17, 1
      %p113 = por %p111, %p112
      %p114 = scmp.ne.s32.totalorder %s106, %s109
      %p115 = scmp.eq.s32.totalorder %s17, 0
      %p116 = por %p114, %p115
      %p117 = scmp.ne.s32.totalorder %s106, %s109
      %p118 = scmp.eq.s32.totalorder %s22, 1
      %p119 = por %p117, %p118
      %p120 = scmp.ne.s32.totalorder %s109, %s110
      %p121 = scmp.eq.s32.totalorder %s22, 0
      %p122 = por %p120, %p121
      %p123 = scmp.ne.s32.totalorder %s109, %s110
      %p124 = scmp.eq.s32.totalorder %s23, 1
      %p125 = por %p123, %p124
      %p127 = scmp.ne.s32.totalorder %s110, %s126
      %p128 = scmp.eq.s32.totalorder %s23, 0
      %p129 = por %p127, %p128
      %p130 = scmp.le.s32.totalorder 1, %s17
      %p131 = scmp.lt.s32.totalorder %s17, 3
      %p132 = pnand %p130, %p131
      %p133 = pneg %p132
      // Predicated region
      $region9: #{tpu_custom_call.1} parent=5 // pred_check
        _
      $region10: #{tpu_custom_call.1} parent=5 // pred_check_branch
        %135 = sbr.rel (%p132) target = $region12
      $region11: #{tpu_custom_call.1} parent=5 // pred_region
        %s136 = ssub.s32 %s17, 1
      $region12: #{tpu_custom_call.1} parent=5 // pred_fallthru
        _
      %p137 = scmp.lt.s32.totalorder %s17, 2
      // Predicated region
      $region13: #{tpu_custom_call.1} parent=5 // pred_check
        %p138 = pneg %p137
      $region14: #{tpu_custom_call.1} parent=5 // pred_check_branch
        %140 = sbr.rel (%p138) target = $region16
      $region15: #{tpu_custom_call.1} parent=5 // pred_region
        // Predicated region
        $region17: #{tpu_custom_call.1} parent=15 // pred_check
          %p141 = pneg %p58
        $region18: #{tpu_custom_call.1} parent=15 // pred_check_branch
          %143 = sbr.rel (%p141) target = $region20
        $region19: #{tpu_custom_call.1} parent=15 // pred_region
          %s144 = sand.u32 %s48, 1
          %s145 = scalar_lea.sflag [#allocation4], %s144
          %s146 = sand.u32 %s48, 1
          %s147 = smul.addr %s146, 2
          %s148 = scalar_lea.vmem [#allocation3], %s147
          %s149 = smul.u32 2, %s25
          %s151 = ssub.s32 32, 32
          %152 = vsyncadd %s145, %s151
          %s153 = smul.addr %s24, 2
          %s154 = sadd.s32 %s149, %s153
          %s155 = smul.addr %s154, 16
          %s156 = scalar_lea.hbm %s0, %s155
          %s158 = sshll.u32 %s148, 4
          %s159 = int_to_ptr.vmem [resolvable:$true] %s158
          %161 = dma.hbm_to_vmem [thread:$0]  %s156, 32, %s159, %s145
        $region20: #{tpu_custom_call.1} parent=15 // pred_fallthru
          _
        // Predicated region
        $region21: #{tpu_custom_call.1} parent=15 // pred_check
          %p162 = pneg %p86
        $region22: #{tpu_custom_call.1} parent=15 // pred_check_branch
          %164 = sbr.rel (%p162) target = $region24
        $region23: #{tpu_custom_call.1} parent=15 // pred_region
          %s165 = sand.u32 %s76, 1
          %s166 = scalar_lea.sflag [#allocation7], %s165
          %s167 = sand.u32 %s76, 1
          %s168 = smul.addr %s167, 4
          %s169 = scalar_lea.vmem [#allocation6], %s168
          %s171 = ssub.s32 64, 64
          %172 = vsyncadd %s166, %s171
          %s173 = sadd.s32 %s26, %s24
          %s174 = smul.addr %s173, 64
          %s175 = scalar_lea.hbm %s1, %s174
          %s177 = sshll.u32 %s169, 4
          %s178 = int_to_ptr.vmem [resolvable:$true] %s177
          %180 = dma.hbm_to_vmem [thread:$0]  %s175, 64, %s178, %s166
        $region24: #{tpu_custom_call.1} parent=15 // pred_fallthru
          _
      $region16: #{tpu_custom_call.1} parent=5 // pred_fallthru
        _
      %p181 = scmp.le.s32.totalorder 1, %s17
      %p182 = scmp.lt.s32.totalorder %s17, 3
      %p183 = pnand %p181, %p182
      %p184 = pneg %p183
      // Predicated region
      $region25: #{tpu_custom_call.1} parent=5 // pred_check
        _
      $region26: #{tpu_custom_call.1} parent=5 // pred_check_branch
        %186 = sbr.rel (%p183) target = $region28
      $region27: #{tpu_custom_call.1} parent=5 // pred_region
        %s187 = ssub.s32 %s17, 1
        %s188 = sand.u32 %s51, 1
        %s189 = scalar_lea.sflag [#allocation4], %s188
        %s190 = sand.u32 %s51, 1
        %s191 = smul.addr %s190, 2
        %s192 = scalar_lea.vmem [#allocation3], %s191
        // Predicated region
        $region29: #{tpu_custom_call.1} parent=27 // pred_check
          %p193 = pneg %p64
        $region30: #{tpu_custom_call.1} parent=27 // pred_check_branch
          %195 = sbr.rel (%p193) target = $region32
        $region31: #{tpu_custom_call.1} parent=27 // pred_region
          %196 = dma.done %s189, 32
        $region32: #{tpu_custom_call.1} parent=27 // pred_fallthru
          _
        %s197 = sand.u32 %s79, 1
        %s198 = scalar_lea.sflag [#allocation7], %s197
        %s199 = sand.u32 %s79, 1
        %s200 = smul.addr %s199, 4
        %s201 = scalar_lea.vmem [#allocation6], %s200
        // Predicated region
        $region33: #{tpu_custom_call.1} parent=27 // pred_check
          %p202 = pneg %p92
        $region34: #{tpu_custom_call.1} parent=27 // pred_check_branch
          %204 = sbr.rel (%p202) target = $region36
        $region35: #{tpu_custom_call.1} parent=27 // pred_region
          %205 = dma.done %s198, 64
        $region36: #{tpu_custom_call.1} parent=27 // pred_fallthru
          _
        %s206 = sand.u32 %s51, 1
        %s207 = scalar_lea.sflag [#allocation4], %s206
        %s208 = sand.u32 %s51, 1
        %s209 = smul.addr %s208, 2
        %s210 = scalar_lea.vmem [#allocation3], %s209
        %p211 = pneg %p64
        %p212 = pneg %p61
        %s213 = sand.u32 %s79, 1
        %s214 = scalar_lea.sflag [#allocation7], %s213
        %s215 = sand.u32 %s79, 1
        %s216 = smul.addr %s215, 4
        %s217 = scalar_lea.vmem [#allocation6], %s216
        %p218 = pneg %p92
        %p219 = pneg %p89
        %p220 = pneg %p122
        %p221 = pneg %p119
        %s222 = sand.u32 %s109, 1
        %s223 = scalar_lea.sflag [#allocation5], %s222
        %s224 = sand.u32 %s109, 1
        %s225 = smul.addr %s224, 8
        %s226 = scalar_lea.vmem [#allocation8], %s225
        %s227 = smul.u32 2, %s28
        %s228 = smul.u32 2, %s28
        %p230 = scmp.eq.s32.totalorder %s29, 0
        // Predicated region
        $region37: #{tpu_custom_call.1} parent=27 // pred_check
          %p231 = pneg %p230
        $region38: #{tpu_custom_call.1} parent=27 // pred_check_branch
          %233 = sbr.rel (%p231) target = $region40
        $region39: #{tpu_custom_call.1} parent=27 // pred_region
          %v234 = vld [vmem:[%s192] sm:$0x3]
          %v235 = vlaneseq
          %v236 = vshrl.u32 %v235, 7
          %v237 = vadd.s32 %v236, 8
          %v238 = vadd.s32 %v236, 16
          %v239 = vadd.s32 %v236, 24
          %v240 = vadd.s32 %v236, 32
          %v241 = vadd.s32 %v236, 40
          %v242 = vadd.s32 %v236, 48
          %v243 = vadd.s32 %v236, 56
          %v244 = vadd.s32 %v236, 64
          %v245 = vadd.s32 %v236, 72
          %v246 = vadd.s32 %v236, 80
          %v247 = vadd.s32 %v236, 88
          %v248 = vadd.s32 %v236, 96
          %v249 = vadd.s32 %v236, 104
          %v250 = vadd.s32 %v236, 112
          %v251 = vadd.s32 %v236, 120
          %v252 = vlaneseq
          %v253 = vshrl.u32 %v252, 7
          %v254 = vsub.s32 0, %v253
          %v255 = vrot.slane %v234, %v254
          %v256 = vlaneseq
          %v257 = vshrl.u32 %v256, 7
          %v258 = vsub.s32 1, %v257
          %v259 = vrot.slane %v234, %v258
          %vm260 = vcmp.eq.s32.totalorder %v236, %v255
          %vm261 = vcmp.eq.s32.totalorder %v236, %v259
          %vm262 = vcmp.eq.s32.totalorder %v237, %v255
          %vm263 = vcmp.eq.s32.totalorder %v237, %v259
          %vm264 = vcmp.eq.s32.totalorder %v238, %v255
          %vm265 = vcmp.eq.s32.totalorder %v238, %v259
          %vm266 = vcmp.eq.s32.totalorder %v239, %v255
          %vm267 = vcmp.eq.s32.totalorder %v239, %v259
          %vm268 = vcmp.eq.s32.totalorder %v240, %v255
          %vm269 = vcmp.eq.s32.totalorder %v240, %v259
          %vm270 = vcmp.eq.s32.totalorder %v241, %v255
          %vm271 = vcmp.eq.s32.totalorder %v241, %v259
          %vm272 = vcmp.eq.s32.totalorder %v242, %v255
          %vm273 = vcmp.eq.s32.totalorder %v242, %v259
          %vm274 = vcmp.eq.s32.totalorder %v243, %v255
          %vm275 = vcmp.eq.s32.totalorder %v243, %v259
          %vm276 = vcmp.eq.s32.totalorder %v244, %v255
          %vm277 = vcmp.eq.s32.totalorder %v244, %v259
          %vm278 = vcmp.eq.s32.totalorder %v245, %v255
          %vm279 = vcmp.eq.s32.totalorder %v245, %v259
          %vm280 = vcmp.eq.s32.totalorder %v246, %v255
          %vm281 = vcmp.eq.s32.totalorder %v246, %v259
          %vm282 = vcmp.eq.s32.totalorder %v247, %v255
          %vm283 = vcmp.eq.s32.totalorder %v247, %v259
          %vm284 = vcmp.eq.s32.totalorder %v248, %v255
          %vm285 = vcmp.eq.s32.totalorder %v248, %v259
          %vm286 = vcmp.eq.s32.totalorder %v249, %v255
          %vm287 = vcmp.eq.s32.totalorder %v249, %v259
          %vm288 = vcmp.eq.s32.totalorder %v250, %v255
          %vm289 = vcmp.eq.s32.totalorder %v250, %v259
          %vm290 = vcmp.eq.s32.totalorder %v251, %v255
          %vm291 = vcmp.eq.s32.totalorder %v251, %v259
          %v292 = vsel %vm260, 1, 0
          %v293 = vsel %vm261, 1, 0
          %v294 = vsel %vm262, 1, 0
          %v295 = vsel %vm263, 1, 0
          %v296 = vsel %vm264, 1, 0
          %v297 = vsel %vm265, 1, 0
          %v298 = vsel %vm266, 1, 0
          %v299 = vsel %vm267, 1, 0
          %v300 = vsel %vm268, 1, 0
          %v301 = vsel %vm269, 1, 0
          %v302 = vsel %vm270, 1, 0
          %v303 = vsel %vm271, 1, 0
          %v304 = vsel %vm272, 1, 0
          %v305 = vsel %vm273, 1, 0
          %v306 = vsel %vm274, 1, 0
          %v307 = vsel %vm275, 1, 0
          %v308 = vsel %vm276, 1, 0
          %v309 = vsel %vm277, 1, 0
          %v310 = vsel %vm278, 1, 0
          %v311 = vsel %vm279, 1, 0
          %v312 = vsel %vm280, 1, 0
          %v313 = vsel %vm281, 1, 0
          %v314 = vsel %vm282, 1, 0
          %v315 = vsel %vm283, 1, 0
          %v316 = vsel %vm284, 1, 0
          %v317 = vsel %vm285, 1, 0
          %v318 = vsel %vm286, 1, 0
          %v319 = vsel %vm287, 1, 0
          %v320 = vsel %vm288, 1, 0
          %v321 = vsel %vm289, 1, 0
          %v322 = vsel %vm290, 1, 0
          %v323 = vsel %vm291, 1, 0
          %v324 = vcvt.s32.f32 %v292
          %v325 = vcvt.s32.f32 %v293
          %v326 = vcvt.s32.f32 %v294
          %v327 = vcvt.s32.f32 %v295
          %v328 = vcvt.s32.f32 %v296
          %v329 = vcvt.s32.f32 %v297
          %v330 = vcvt.s32.f32 %v298
          %v331 = vcvt.s32.f32 %v299
          %v332 = vcvt.s32.f32 %v300
          %v333 = vcvt.s32.f32 %v301
          %v334 = vcvt.s32.f32 %v302
          %v335 = vcvt.s32.f32 %v303
          %v336 = vcvt.s32.f32 %v304
          %v337 = vcvt.s32.f32 %v305
          %v338 = vcvt.s32.f32 %v306
          %v339 = vcvt.s32.f32 %v307
          %v340 = vcvt.s32.f32 %v308
          %v341 = vcvt.s32.f32 %v309
          %v342 = vcvt.s32.f32 %v310
          %v343 = vcvt.s32.f32 %v311
          %v344 = vcvt.s32.f32 %v312
          %v345 = vcvt.s32.f32 %v313
          %v346 = vcvt.s32.f32 %v314
          %v347 = vcvt.s32.f32 %v315
          %v348 = vcvt.s32.f32 %v316
          %v349 = vcvt.s32.f32 %v317
          %v350 = vcvt.s32.f32 %v318
          %v351 = vcvt.s32.f32 %v319
          %v352 = vcvt.s32.f32 %v320
          %v353 = vcvt.s32.f32 %v321
          %v354 = vcvt.s32.f32 %v322
          %v355 = vcvt.s32.f32 %v323
          %v356 = vpack.c.bf16 %v326, %v324
          %v357 = vpack.c.bf16 %v327, %v325
          %v358 = vpack.c.bf16 %v330, %v328
          %v359 = vpack.c.bf16 %v331, %v329
          %v360 = vpack.c.bf16 %v334, %v332
          %v361 = vpack.c.bf16 %v335, %v333
          %v362 = vpack.c.bf16 %v338, %v336
          %v363 = vpack.c.bf16 %v339, %v337
          %v364 = vpack.c.bf16 %v342, %v340
          %v365 = vpack.c.bf16 %v343, %v341
          %v366 = vpack.c.bf16 %v346, %v344
          %v367 = vpack.c.bf16 %v347, %v345
          %v368 = vpack.c.bf16 %v350, %v348
          %v369 = vpack.c.bf16 %v351, %v349
          %v370 = vpack.c.bf16 %v354, %v352
          %v371 = vpack.c.bf16 %v355, %v353
          %372 = vst [vmem:[#allocation2] sm:$0xff] %v356
          %373 = vst [vmem:[#allocation2 + $0x8] sm:$0xff] %v357
          %374 = vst [vmem:[#allocation2 + $0x10] sm:$0xff] %v358
          %375 = vst [vmem:[#allocation2 + $0x18] sm:$0xff] %v359
          %376 = vst [vmem:[#allocation2 + $0x20] sm:$0xff] %v360
          %377 = vst [vmem:[#allocation2 + $0x28] sm:$0xff] %v361
          %378 = vst [vmem:[#allocation2 + $0x30] sm:$0xff] %v362
          %379 = vst [vmem:[#allocation2 + $0x38] sm:$0xff] %v363
          %380 = vst [vmem:[#allocation2 + $0x40] sm:$0xff] %v364
          %381 = vst [vmem:[#allocation2 + $0x48] sm:$0xff] %v365
          %382 = vst [vmem:[#allocation2 + $0x50] sm:$0xff] %v366
          %383 = vst [vmem:[#allocation2 + $0x58] sm:$0xff] %v367
          %384 = vst [vmem:[#allocation2 + $0x60] sm:$0xff] %v368
          %385 = vst [vmem:[#allocation2 + $0x68] sm:$0xff] %v369
          %386 = vst [vmem:[#allocation2 + $0x70] sm:$0xff] %v370
          %387 = vst [vmem:[#allocation2 + $0x78] sm:$0xff] %v371
        $region40: #{tpu_custom_call.1} parent=27 // pred_fallthru
          _
        %v388 = vld [vmem:[%s201] sm:$0xf]
        %v389 = vld [vmem:[#allocation2] sm:$0xff]
        %v390 = vld [vmem:[#allocation2 + $0x8] sm:$0xff]
        %v391 = vld [vmem:[#allocation2 + $0x10] sm:$0xff]
        %v392 = vld [vmem:[#allocation2 + $0x18] sm:$0xff]
        %v393 = vld [vmem:[#allocation2 + $0x20] sm:$0xff]
        %v394 = vld [vmem:[#allocation2 + $0x28] sm:$0xff]
        %v395 = vld [vmem:[#allocation2 + $0x30] sm:$0xff]
        %v396 = vld [vmem:[#allocation2 + $0x38] sm:$0xff]
        %v397 = vld [vmem:[#allocation2 + $0x40] sm:$0xff]
        %v398 = vld [vmem:[#allocation2 + $0x48] sm:$0xff]
        %v399 = vld [vmem:[#allocation2 + $0x50] sm:$0xff]
        %v400 = vld [vmem:[#allocation2 + $0x58] sm:$0xff]
        %v401 = vld [vmem:[#allocation2 + $0x60] sm:$0xff]
        %v402 = vld [vmem:[#allocation2 + $0x68] sm:$0xff]
        %v403 = vld [vmem:[#allocation2 + $0x70] sm:$0xff]
        %v404 = vld [vmem:[#allocation2 + $0x78] sm:$0xff]
        %v405 = vpack.c.bf16 %v388, %v388
        %v406 = vunpack.c.l.bf16 %v405
        %v407 = vsub.f32 %v388, %v406
        %v408 = vpack.c.bf16 %v407, %v407
        %409 = vmatprep.subr.bf16.mxu0 %v390
        %410 = vmatpush1.bf16.msra.mxu0 %v389
        %411 = vmatprep.subr.bf16.mxu0 %v392
        %412 = vmatpush1.bf16.msra.mxu0 %v391
        %413 = vmatprep.subr.bf16.mxu0 %v394
        %414 = vmatpush1.bf16.msra.mxu0 %v393
        %415 = vmatprep.subr.bf16.mxu0 %v396
        %416 = vmatpush1.bf16.msra.mxu0 %v395
        %417 = vmatprep.subr.bf16.mxu0 %v398
        %418 = vmatpush1.bf16.msra.mxu0 %v397
        %419 = vmatprep.subr.bf16.mxu0 %v400
        %420 = vmatpush1.bf16.msra.mxu0 %v399
        %421 = vmatprep.subr.bf16.mxu0 %v402
        %422 = vmatpush1.bf16.msra.mxu0 %v401
        %423 = vmatprep.subr.bf16.mxu0 %v404
        %424 = vmatpush1.bf16.msra.mxu0 %v403
        %425 = vmatprep.subr.bf16.mxu0 0
        %426 = vmatpush1.bf16.msra.mxu0 0
        %427 = vmatprep.subr.bf16.mxu0 0
        %428 = vmatpush1.bf16.msra.mxu0 0
        %429 = vmatprep.subr.bf16.mxu0 0
        %430 = vmatpush1.bf16.msra.mxu0 0
        %431 = vmatprep.subr.bf16.mxu0 0
        %432 = vmatpush1.bf16.msra.mxu0 0
        %433 = vmatprep.subr.bf16.mxu0 0
        %434 = vmatpush1.bf16.msra.mxu0 0
        %435 = vmatprep.subr.bf16.mxu0 0
        %436 = vmatpush1.bf16.msra.mxu0 0
        %437 = vmatprep.subr.bf16.mxu0 0
        %438 = vmatpush1.bf16.msra.mxu0 0
        %439 = vmatprep.subr.bf16.mxu0 0
        %440 = vmatpush1.bf16.msra.mxu0 0
        %441 = vmatprep.mubr.bf16.mxu0 0
        %442 = vmatmul.mubr.bf16.gmra.mrb[0].mxu0 %v408
        %v443 = vpop.f32.mrb[0].mxu0
        %v444 = vadd.f32 0.0, %v443
        %v445 = vpop.f32.mrb[0].mxu0
        %v446 = vadd.f32 0.0, %v445
        %v447 = vpop.f32.mrb[0].mxu0
        %v448 = vpop.f32.mrb[0].mxu0
        %449 = vdwg.mxu0
        %450 = vmatprep.subr.bf16.mxu0 %v390
        %451 = vmatpush1.bf16.msra.mxu0 %v389
        %452 = vmatprep.subr.bf16.mxu0 %v392
        %453 = vmatpush1.bf16.msra.mxu0 %v391
        %454 = vmatprep.subr.bf16.mxu0 %v394
        %455 = vmatpush1.bf16.msra.mxu0 %v393
        %456 = vmatprep.subr.bf16.mxu0 %v396
        %457 = vmatpush1.bf16.msra.mxu0 %v395
        %458 = vmatprep.subr.bf16.mxu0 %v398
        %459 = vmatpush1.bf16.msra.mxu0 %v397
        %460 = vmatprep.subr.bf16.mxu0 %v400
        %461 = vmatpush1.bf16.msra.mxu0 %v399
        %462 = vmatprep.subr.bf16.mxu0 %v402
        %463 = vmatpush1.bf16.msra.mxu0 %v401
        %464 = vmatprep.subr.bf16.mxu0 %v404
        %465 = vmatpush1.bf16.msra.mxu0 %v403
        %466 = vmatprep.subr.bf16.mxu0 0
        %467 = vmatpush1.bf16.msra.mxu0 0
        %468 = vmatprep.subr.bf16.mxu0 0
        %469 = vmatpush1.bf16.msra.mxu0 0
        %470 = vmatprep.subr.bf16.mxu0 0
        %471 = vmatpush1.bf16.msra.mxu0 0
        %472 = vmatprep.subr.bf16.mxu0 0
        %473 = vmatpush1.bf16.msra.mxu0 0
        %474 = vmatprep.subr.bf16.mxu0 0
        %475 = vmatpush1.bf16.msra.mxu0 0
        %476 = vmatprep.subr.bf16.mxu0 0
        %477 = vmatpush1.bf16.msra.mxu0 0
        %478 = vmatprep.subr.bf16.mxu0 0
        %479 = vmatpush1.bf16.msra.mxu0 0
        %480 = vmatprep.subr.bf16.mxu0 0
        %481 = vmatpush1.bf16.msra.mxu0 0
        %482 = vmatprep.mubr.bf16.mxu0 0
        %483 = vmatmul.mubr.bf16.gmra.mrb[0].mxu0 %v405
        %v484 = vpop.f32.mrb[0].mxu0
        %v485 = vadd.f32 %v444, %v484
        %v486 = vpop.f32.mrb[0].mxu0
        %v487 = vadd.f32 %v446, %v486
        %v488 = vpop.f32.mrb[0].mxu0
        %v489 = vpop.f32.mrb[0].mxu0
        %490 = vdwg.mxu0
        %v491 = vunpack.c.l.bf16 %v408
        %v492 = vsub.f32 %v407, %v491
        %v493 = vpack.c.bf16 %v492, %v492
        %494 = vmatprep.subr.bf16.mxu0 %v390
        %495 = vmatpush1.bf16.msra.mxu0 %v389
        %496 = vmatprep.subr.bf16.mxu0 %v392
        %497 = vmatpush1.bf16.msra.mxu0 %v391
        %498 = vmatprep.subr.bf16.mxu0 %v394
        %499 = vmatpush1.bf16.msra.mxu0 %v393
        %500 = vmatprep.subr.bf16.mxu0 %v396
        %501 = vmatpush1.bf16.msra.mxu0 %v395
        %502 = vmatprep.subr.bf16.mxu0 %v398
        %503 = vmatpush1.bf16.msra.mxu0 %v397
        %504 = vmatprep.subr.bf16.mxu0 %v400
        %505 = vmatpush1.bf16.msra.mxu0 %v399
        %506 = vmatprep.subr.bf16.mxu0 %v402
        %507 = vmatpush1.bf16.msra.mxu0 %v401
        %508 = vmatprep.subr.bf16.mxu0 %v404
        %509 = vmatpush1.bf16.msra.mxu0 %v403
        %510 = vmatprep.subr.bf16.mxu0 0
        %511 = vmatpush1.bf16.msra.mxu0 0
        %512 = vmatprep.subr.bf16.mxu0 0
        %513 = vmatpush1.bf16.msra.mxu0 0
        %514 = vmatprep.subr.bf16.mxu0 0
        %515 = vmatpush1.bf16.msra.mxu0 0
        %516 = vmatprep.subr.bf16.mxu0 0
        %517 = vmatpush1.bf16.msra.mxu0 0
        %518 = vmatprep.subr.bf16.mxu0 0
        %519 = vmatpush1.bf16.msra.mxu0 0
        %520 = vmatprep.subr.bf16.mxu0 0
        %521 = vmatpush1.bf16.msra.mxu0 0
        %522 = vmatprep.subr.bf16.mxu0 0
        %523 = vmatpush1.bf16.msra.mxu0 0
        %524 = vmatprep.subr.bf16.mxu0 0
        %525 = vmatpush1.bf16.msra.mxu0 0
        %526 = vmatprep.mubr.bf16.mxu0 0
        %527 = vmatmul.mubr.bf16.gmra.mrb[0].mxu0 %v493
        %v528 = vpop.f32.mrb[0].mxu0
        %v529 = vadd.f32 0.0, %v528
        %v530 = vpop.f32.mrb[0].mxu0
        %v531 = vadd.f32 0.0, %v530
        %v532 = vpop.f32.mrb[0].mxu0
        %v533 = vpop.f32.mrb[0].mxu0
        %534 = vdwg.mxu0
        %v535 = vadd.f32 %v485, %v529
        %v536 = vadd.f32 %v487, %v531
        %v539 = vcombine.low %v535, %v536
        %541 = vst [vmem:[%s226] sm:$0xff] %v539
        %s542 = sand.u32 %s109, 1
        %s543 = scalar_lea.sflag [#allocation5], %s542
        %s544 = sand.u32 %s109, 1
        %s545 = smul.addr %s544, 8
        %s546 = scalar_lea.vmem [#allocation8], %s545
        // Predicated region
        $region41: #{tpu_custom_call.1} parent=27 // pred_check
          %p547 = pneg %p119
        $region42: #{tpu_custom_call.1} parent=27 // pred_check_branch
          %549 = sbr.rel (%p547) target = $region44
        $region43: #{tpu_custom_call.1} parent=27 // pred_region
          %s550 = smul.u32 2, %s28
          %s552 = ssub.s32 128, 128
          %553 = vsyncadd %s543, %s552
          %s554 = smul.addr %s29, 2
          %s555 = sadd.s32 %s550, %s554
          %s556 = smul.addr %s27, 2
          %s557 = sadd.s32 %s555, %s556
          %s558 = smul.addr %s557, 64
          %s559 = scalar_lea.hbm %s2, %s558
          %s561 = sshll.u32 %s546, 4
          %s562 = int_to_ptr.vmem [resolvable:$true] %s561
          %564 = dma.vmem_to_hbm [thread:$0]  %s562, 128, %s559, %s543
        $region44: #{tpu_custom_call.1} parent=27 // pred_fallthru
          _
      $region28: #{tpu_custom_call.1} parent=5 // pred_fallthru
        _
      %p565 = scmp.le.s32.totalorder 2, %s17
      // Predicated region
      $region45: #{tpu_custom_call.1} parent=5 // pred_check
        %p566 = pneg %p565
      $region46: #{tpu_custom_call.1} parent=5 // pred_check_branch
        %568 = sbr.rel (%p566) target = $region48
      $region47: #{tpu_custom_call.1} parent=5 // pred_region
        %s569 = ssub.s32 %s17, 2
        // Predicated region
        $region49: #{tpu_custom_call.1} parent=47 // pred_check
          %p570 = pneg %p125
        $region50: #{tpu_custom_call.1} parent=47 // pred_check_branch
          %572 = sbr.rel (%p570) target = $region52
        $region51: #{tpu_custom_call.1} parent=47 // pred_region
          %s573 = sand.u32 %s110, 1
          %s574 = scalar_lea.sflag [#allocation5], %s573
          %s575 = sand.u32 %s110, 1
          %s576 = smul.addr %s575, 8
          %s577 = scalar_lea.vmem [#allocation8], %s576
          %578 = dma.done %s574, 128
        $region52: #{tpu_custom_call.1} parent=47 // pred_fallthru
          _
      $region48: #{tpu_custom_call.1} parent=5 // pred_fallthru
        _
    $region6: #{tpu_custom_call.1} parent=1 // loop_footer
      %s21 = sadd.s32 1, %s17
    $region7: #{tpu_custom_call.1} parent=1 // loop_footer_branch
      %16 = sbr.rel target = $region3
    $region8: #{tpu_custom_call.1} parent=1 // loop_exit
      _
    %579 = vsyncpa [#allocation4], 1
    %s580 = scalar_lea.sflag [#allocation4], 1
    %581 = vsyncpa %s580, 1
    %582 = vsyncpa [#allocation7], 1
    %s583 = scalar_lea.sflag [#allocation7], 1
    %584 = vsyncpa %s583, 1
    %585 = vsyncpa [#allocation5], 1
    %s586 = scalar_lea.sflag [#allocation5], 1
    %587 = vsyncpa %s586, 1

</llo_original>
